<compile_context>
chip_gen: v7x
topology: tpu7x:2x2x1
jax: 0.10.0
libtpu: 0.0.40
codegen_flags: <defaults>
</compile_context>

<pallas_src>
import functools

import jax
import jax.numpy as jnp
from jax import lax
from jax.experimental import pallas as pl
from jax.experimental.pallas import tpu as pltpu


# ----------------------------------------------------------------------------
# helpers
# ----------------------------------------------------------------------------
def _pick_tile(dim, cap):
    """Largest legal block extent for `dim` under `cap`: the full dim if it
    fits, otherwise the largest 128-multiple divisor of dim that is <= cap."""
    if dim <= cap:
        return dim
    t = (cap // 128) * 128
    while t >= 128:
        if dim % t == 0:
            return t
        t -= 128
    raise ValueError(
        f"dimension {dim} has no 128-multiple tile <= {cap}; "
        "pad the layer to a multiple of 128")


def _pad_to(n, m):
    return ((n + m - 1) // m) * m


# ----------------------------------------------------------------------------
# Pass 1: per-input-column DoRA scale
#   col_scale[k] = dora_scale[k] / (||W[:, k] + delta[:, k]||_2 + eps)
# Grid: (K_tiles, O_tiles); O (axis 1, last) is the sum-of-squares reduction.
# ----------------------------------------------------------------------------
def dora_col_scale_kernel(w_ref, a_ref, b_ref, ds_ref, cs_ref, ssq_ref,
                          *, lora_scale, eps):
    o = pl.program_id(1)

    @pl.when(o == 0)
    def _():
        ssq_ref[...] = jnp.zeros_like(ssq_ref)

    # LoRA delta for this (O-tile, K-tile) block; norm math stays in f32.
    delta = jnp.dot(b_ref[...].astype(jnp.float32),
                    a_ref[...].astype(jnp.float32),
                    preferred_element_type=jnp.float32) * lora_scale
    wp = w_ref[...].astype(jnp.float32) + delta            # (to, tk)
    ssq_ref[...] += jnp.sum(wp * wp, axis=0, keepdims=True)

    @pl.when(o == pl.num_programs(1) - 1)
    def _():
        # eps placement matches the PyTorch reference: sqrt(ssq) + eps.
        norm = jnp.sqrt(ssq_ref[...]) + eps
        cs_ref[...] = ds_ref[...].astype(jnp.float32) / norm


# ----------------------------------------------------------------------------
# Pass 2: out = (x*cs) @ W^T + lora_scale * (u @ B^T) + bias
#   u = x @ (cs*A)^T  (M, r)  precomputed in the wrapper, used only at k==last.
# Grid: (M_tiles, N_tiles, K_tiles); K (last axis) is the reduction.
# ----------------------------------------------------------------------------
_CONTRACT_LAST = (((1,), (1,)), ((), ()))   # lhs @ rhs^T, no transpose materialized


def dora_matmul_kernel(x_ref, cs_ref, w_ref, u_ref, bt_ref, bias_ref, o_ref,
                       acc_ref, *, lora_scale, compute_dtype):
    k = pl.program_id(2)

    @pl.when(k == 0)
    def _():
        acc_ref[...] = jnp.zeros_like(acc_ref)

    # Column scale applied in the compute dtype (no f32 round trip on bf16).
    xs = x_ref[...].astype(compute_dtype) * cs_ref[...]
    acc_ref[...] += lax.dot_general(
        xs, w_ref[...].astype(compute_dtype),
        dimension_numbers=_CONTRACT_LAST,
        preferred_element_type=jnp.float32)

    @pl.when(k == pl.num_programs(2) - 1)
    def _():
        # Tiny rank-r epilogue matmul: (tm, r) @ (r, tn) -> (tm, tn), f32.
        lora = jnp.dot(u_ref[...], bt_ref[...].astype(jnp.float32),
                       preferred_element_type=jnp.float32)
        out = acc_ref[...] + lora_scale * lora + bias_ref[...].astype(jnp.float32)
        o_ref[...] = out.astype(o_ref.dtype)


# ----------------------------------------------------------------------------
# Wrapper
# ----------------------------------------------------------------------------
def dora_linear(x, w, a, b, dora_scale, bias, *, alpha, rank,
                norm_epsilon=False,
                tm=512, tn=512, tk=512, to=1024,
                mxu_bf16=None,
                vmem_budget_bytes=48 * 1024 * 1024):
    M, K = x.shape
    O, Kw = w.shape
    r, Ka = a.shape
    assert Kw == K and Ka == K and b.shape == (O, r), "shape mismatch"
    lora_scale = float(alpha) / float(rank)
    eps = float(jnp.finfo(jnp.float32).eps) if norm_epsilon else 0.0

    # bf16 MXU only when both activation and weight are bf16 (or forced).
    if mxu_bf16 is None:
        mxu_bf16 = (x.dtype == jnp.bfloat16 and w.dtype == jnp.bfloat16)
    compute_dtype = jnp.bfloat16 if mxu_bf16 else jnp.float32

    # Tile selection: caps shrink to full dims / largest 128-multiple divisor.
    tm = _pick_tile(M, tm)
    tn = _pick_tile(O, tn)
    tk = _pick_tile(K, tk)
    to = _pick_tile(O, to)

    def _isize(dt):
        return jnp.dtype(dt).itemsize

    # Rough per-step VMEM working-set estimate (double-buffered I/O + f32 acc),
    # checked against a budget that is safe for v7x's 64 MiB VMEM per core.
    r_lane, r_sub = _pad_to(r, 128), _pad_to(r, 8)
    est2 = 2 * (tm * _pad_to(tk, 128) * _isize(x.dtype)            # x
                + 8 * _pad_to(tk, 128) * _isize(compute_dtype)     # col_scale
                + tn * _pad_to(tk, 128) * _isize(w.dtype)          # W
                + tm * r_lane * 4                                  # u (f32)
                + r_sub * _pad_to(tn, 128) * _isize(b.dtype)       # B^T
                + 8 * _pad_to(tn, 128) * _isize(bias.dtype)        # bias
                + tm * _pad_to(tn, 128) * _isize(x.dtype))         # out
    est2 += tm * _pad_to(tn, 128) * 4                              # acc scratch
    est1 = 2 * (to * _pad_to(tk, 128) * _isize(w.dtype)
                + r_sub * _pad_to(tk, 128) * _isize(a.dtype)
                + to * r_lane * _isize(b.dtype)
                + 2 * 8 * _pad_to(tk, 128) * 4)
    est1 += 8 * _pad_to(tk, 128) * 4
    est = max(est1, est2)
    if est > vmem_budget_bytes:
        raise ValueError(
            f"tile config needs ~{est / 2**20:.1f} MiB VMEM > budget "
            f"{vmem_budget_bytes / 2**20:.1f} MiB; shrink tm/tn/tk/to "
            "(v7x has 64 MiB VMEM per TensorCore)")

    ds2 = dora_scale.reshape(1, K)
    bias2 = bias.reshape(1, O)

    # ---- pass 1: (1, K) column scale (one-shot scan of W) -----------------
    col_scale = pl.pallas_call(
        functools.partial(dora_col_scale_kernel,
                          lora_scale=lora_scale, eps=eps),
        out_shape=jax.ShapeDtypeStruct((1, K), jnp.float32),
        grid_spec=pltpu.PrefetchScalarGridSpec(
            num_scalar_prefetch=0,
            grid=(K // tk, O // to),
            in_specs=[
                pl.BlockSpec((to, tk), lambda k, o: (o, k)),   # W
                pl.BlockSpec((r, tk), lambda k, o: (0, k)),    # A (lora_down)
                pl.BlockSpec((to, r), lambda k, o: (o, 0)),    # B (lora_up)
                pl.BlockSpec((1, tk), lambda k, o: (0, k)),    # dora_scale
            ],
            out_specs=pl.BlockSpec((1, tk), lambda k, o: (0, k)),
            scratch_shapes=[pltpu.VMEM((1, tk), jnp.float32)],
        ),
        compiler_params=pltpu.CompilerParams(
            dimension_semantics=("parallel", "arbitrary"),
            vmem_limit_bytes=vmem_budget_bytes),
    )(w, a, b, ds2)

    # Rank projection hoisted out of the N grid axis (tiny, O(M*K*r) work):
    #   (x*cs) @ A^T == x @ (cs*A)^T, so only A (r, K) is pre-scaled.
    cs_cd = col_scale.astype(compute_dtype)                         # (1, K)
    a_scaled = (a.astype(jnp.float32) * col_scale).astype(compute_dtype)
    u = lax.dot_general(x.astype(compute_dtype), a_scaled,
                        dimension_numbers=_CONTRACT_LAST,
                        preferred_element_type=jnp.float32)         # (M, r)
    b_t = jnp.transpose(b)                                          # (r, O)

    # ---- pass 2: main matmul ----------------------------------------------
    # (If profiling on v5e shows exposed DMA on the first k steps, add
    #  pipeline_mode=pl.Buffered(3) to the x / W BlockSpecs below.)
    out = pl.pallas_call(
        functools.partial(dora_matmul_kernel,
                          lora_scale=lora_scale, compute_dtype=compute_dtype),
        out_shape=jax.ShapeDtypeStruct((M, O), x.dtype),
        grid_spec=pltpu.PrefetchScalarGridSpec(
            num_scalar_prefetch=0,
            grid=(M // tm, O // tn, K // tk),
            in_specs=[
                pl.BlockSpec((tm, tk), lambda m, n, k: (m, k)),  # x
                pl.BlockSpec((1, tk), lambda m, n, k: (0, k)),   # col_scale
                pl.BlockSpec((tn, tk), lambda m, n, k: (n, k)),  # W
                pl.BlockSpec((tm, r), lambda m, n, k: (m, 0)),   # u (epilogue only)
                pl.BlockSpec((r, tn), lambda m, n, k: (0, n)),   # B^T (lane-dense)
                pl.BlockSpec((1, tn), lambda m, n, k: (0, n)),   # bias
            ],
            out_specs=pl.BlockSpec((tm, tn), lambda m, n, k: (m, n)),
            scratch_shapes=[pltpu.VMEM((tm, tn), jnp.float32)],
        ),
        compiler_params=pltpu.CompilerParams(
            dimension_semantics=("parallel", "parallel", "arbitrary"),
            vmem_limit_bytes=vmem_budget_bytes),
    )(x, cs_cd, w, u, b_t, bias2)
    return out


# ----------------------------------------------------------------------------
# Pure-JAX reference mirroring DoRAModule.forward (Linear branch)
# ----------------------------------------------------------------------------
def dora_linear_ref(x, w, a, b, dora_scale, bias, *, alpha, rank,
                    norm_epsilon=False):
    scale = float(alpha) / float(rank)
    eps = float(jnp.finfo(jnp.float32).eps) if norm_epsilon else 0.0
    xf, wf = x.astype(jnp.float32), w.astype(jnp.float32)
    af, bf = a.astype(jnp.float32), b.astype(jnp.float32)
    dsf = dora_scale.astype(jnp.float32)
    delta = (bf @ af) * scale
    wp = wf + delta
    norm = jnp.linalg.norm(wp.T, axis=1, keepdims=True).T + eps   # (1, K)
    wp_scaled = dsf.reshape(1, -1) * (wp / norm)
    return xf @ wp_scaled.T + bias.astype(jnp.float32).reshape(1, -1)


if __name__ == "__main__":
    # nn.Linear(in=512, out=384) wrapped by DoRAModule(rank=16, alpha=8.0);
    # x is (batch*seq, in) = (256, 512). All 128-multiples so the explicit-tile
    # run exercises >= 2 steps on every grid axis of both passes.
    M, K, O, RANK = 256, 512, 384, 16
    ALPHA = 8.0

    key = jax.random.PRNGKey(0)
    kx, kw, ka, kb, kbias = jax.random.split(key, 5)

    x = jax.random.normal(kx, (M, K), dtype=jnp.float32)
    w = jax.random.normal(kw, (O, K), dtype=jnp.float32) * 0.1     # orig weight
    bias = jax.random.normal(kbias, (O,), dtype=jnp.float32) * 0.1
    a = jax.random.normal(ka, (RANK, K), dtype=jnp.float32) * 0.05  # lora_down
    b = jax.random.normal(kb, (O, RANK), dtype=jnp.float32) * 0.05  # lora_up
    # dora_scale initialized to per-column norm of the original weight (1, in).
    dora_scale = jnp.linalg.norm(w.T, axis=1, keepdims=True).T      # (1, K)

    ref = dora_linear_ref(x, w, a, b, dora_scale, bias, alpha=ALPHA, rank=RANK)

    # --- f32, small explicit tiles -> multi-step grids (tight check) ---
    out = dora_linear(x, w, a, b, dora_scale, bias, alpha=ALPHA, rank=RANK,
                      tm=128, tn=128, tk=256, to=128)
    out = jax.block_until_ready(out)
    assert jnp.allclose(out, ref, atol=1e-4, rtol=1e-4), "f32 tiled mismatch"

    # --- f32, default (large) tile caps -> auto-shrunk to full dims ---
    out_big = dora_linear(x, w, a, b, dora_scale, bias, alpha=ALPHA, rank=RANK)
    out_big = jax.block_until_ready(out_big)
    assert jnp.allclose(out_big, ref, atol=1e-4, rtol=1e-4), "f32 default mismatch"

    # --- bf16 path: MXU in bf16, f32 accumulation & norm math (loose check) ---
    xb, wb = x.astype(jnp.bfloat16), w.astype(jnp.bfloat16)
    ab, bb = a.astype(jnp.bfloat16), b.astype(jnp.bfloat16)
    dsb, biasb = dora_scale.astype(jnp.bfloat16), bias.astype(jnp.bfloat16)
    out_bf16 = dora_linear(xb, wb, ab, bb, dsb, biasb, alpha=ALPHA, rank=RANK,
                           tm=128, tn=128, tk=256, to=128)
    out_bf16 = jax.block_until_ready(out_bf16)
    ref_bf16 = dora_linear_ref(xb, wb, ab, bb, dsb, biasb, alpha=ALPHA, rank=RANK)
    assert jnp.allclose(out_bf16.astype(jnp.float32), ref_bf16,
                        atol=0.1, rtol=0.1), "bf16 mismatch"

    print("KERNEL_OK")
</pallas_src>

<mosaic_0001>
module attributes {stable_mosaic.version = 11 : i64} {
  func.func @dora_col_scale_kernel(%arg0: i32, %arg1: i32, %arg2: memref<128x256xf32, #tpu.memory_space<vmem>>, %arg3: memref<16x256xf32, #tpu.memory_space<vmem>>, %arg4: memref<128x16xf32, #tpu.memory_space<vmem>>, %arg5: memref<1x256xf32, #tpu.memory_space<vmem>>, %arg6: memref<1x256xf32, #tpu.memory_space<vmem>>, %arg7: memref<1x256xf32, #tpu.memory_space<vmem>>) attributes {dimension_semantics = [#tpu.dimension_semantics<parallel>, #tpu.dimension_semantics<arbitrary>], iteration_bounds = array<i64: 2, 3>, scalar_prefetch = 0 : i64, scratch_operands = 1 : i64, tpu.core_type = #tpu.core_type<tc>, window_params = [{transform_indices = @transform_0, window_bounds = array<i64: 128, 256>}, {transform_indices = @transform_1, window_bounds = array<i64: 16, 256>}, {transform_indices = @transform_2, window_bounds = array<i64: 128, 16>}, {transform_indices = @transform_3, window_bounds = array<i64: 1, 256>}, {transform_indices = @transform_4, window_bounds = array<i64: 1, 256>}]} {
    %c0_i32 = arith.constant 0 : i32
    %0 = arith.cmpi eq, %arg1, %c0_i32 : i32
    %1 = arith.extui %0 : i1 to i32
    %c0_i32_0 = arith.constant 0 : i32
    %2 = arith.cmpi ne, %1, %c0_i32_0 : i32
    scf.if %2 {
      %cst_13 = arith.constant 0.000000e+00 : f32
      %19 = vector.broadcast %cst_13 : f32 to vector<1x256xf32>
      %c0_14 = arith.constant 0 : index
      %c0_15 = arith.constant 0 : index
      %20 = vector.load %arg7[%c0_14, %c0_15] : memref<1x256xf32, #tpu.memory_space<vmem>>, vector<1x256xf32>
      tpu.vector_store %arg7[%c0_14, %c0_15], %19 {strides = array<i32>} : memref<1x256xf32, #tpu.memory_space<vmem>>, vector<1x256xf32>,
    } else {
    }
    %c0 = arith.constant 0 : index
    %c0_1 = arith.constant 0 : index
    %3 = vector.load %arg4[%c0, %c0_1] : memref<128x16xf32, #tpu.memory_space<vmem>>, vector<128x16xf32>
    %c0_2 = arith.constant 0 : index
    %c0_3 = arith.constant 0 : index
    %4 = vector.load %arg3[%c0_2, %c0_3] : memref<16x256xf32, #tpu.memory_space<vmem>>, vector<16x256xf32>
    %cst = arith.constant dense<0.000000e+00> : vector<128x256xf32>
    %5 = tpu.matmul %3, %4, %cst {dimension_numbers = #tpu.dot_dimension_numbers<[1], [0], [0], [1], [0, 0, 1, 1], [], []>} : vector<128x16xf32>, vector<16x256xf32>, vector<128x256xf32> -> vector<128x256xf32>
    %cst_4 = arith.constant 5.000000e-01 : f32
    %6 = vector.broadcast %cst_4 : f32 to vector<128x256xf32>
    %7 = arith.mulf %5, %6 : vector<128x256xf32>
    %c0_5 = arith.constant 0 : index
    %c0_6 = arith.constant 0 : index
    %8 = vector.load %arg2[%c0_5, %c0_6] : memref<128x256xf32, #tpu.memory_space<vmem>>, vector<128x256xf32>
    %9 = arith.addf %8, %7 : vector<128x256xf32>
    %c0_7 = arith.constant 0 : index
    %c0_8 = arith.constant 0 : index
    %10 = vector.load %arg7[%c0_7, %c0_8] : memref<1x256xf32, #tpu.memory_space<vmem>>, vector<1x256xf32>
    %11 = arith.mulf %9, %9 : vector<128x256xf32>
    %cst_9 = arith.constant dense<0.000000e+00> : vector<256xf32>
    %12 = vector.multi_reduction <add>, %11, %cst_9 [0] : vector<128x256xf32> to vector<256xf32>
    %13 = vector.shape_cast %12 : vector<256xf32> to vector<1x256xf32>
    %14 = arith.addf %10, %13 : vector<1x256xf32>
    %c0_10 = arith.constant 0 : index
    %c0_11 = arith.constant 0 : index
    %15 = vector.load %arg7[%c0_10, %c0_11] : memref<1x256xf32, #tpu.memory_space<vmem>>, vector<1x256xf32>
    tpu.vector_store %arg7[%c0_10, %c0_11], %14 {strides = array<i32>} : memref<1x256xf32, #tpu.memory_space<vmem>>, vector<1x256xf32>,
    %c2_i32 = arith.constant 2 : i32
    %16 = arith.cmpi eq, %arg1, %c2_i32 : i32
    %17 = arith.extui %16 : i1 to i32
    %c0_i32_12 = arith.constant 0 : i32
    %18 = arith.cmpi ne, %17, %c0_i32_12 : i32
    scf.if %18 {
      %c0_13 = arith.constant 0 : index
      %c0_14 = arith.constant 0 : index
      %19 = vector.load %arg7[%c0_13, %c0_14] : memref<1x256xf32, #tpu.memory_space<vmem>>, vector<1x256xf32>
      %20 = math.sqrt %19 : vector<1x256xf32>
      %cst_15 = arith.constant 0.000000e+00 : f32
      %21 = vector.broadcast %cst_15 : f32 to vector<1x256xf32>
      %22 = arith.addf %20, %21 : vector<1x256xf32>
      %c0_16 = arith.constant 0 : index
      %c0_17 = arith.constant 0 : index
      %23 = vector.load %arg5[%c0_16, %c0_17] : memref<1x256xf32, #tpu.memory_space<vmem>>, vector<1x256xf32>
      %24 = arith.divf %23, %22 : vector<1x256xf32>
      %c0_18 = arith.constant 0 : index
      %c0_19 = arith.constant 0 : index
      %25 = vector.load %arg6[%c0_18, %c0_19] : memref<1x256xf32, #tpu.memory_space<vmem>>, vector<1x256xf32>
      tpu.vector_store %arg6[%c0_18, %c0_19], %24 {strides = array<i32>} : memref<1x256xf32, #tpu.memory_space<vmem>>, vector<1x256xf32>,
    } else {
    }
    return
  }
  func.func @transform_0(%arg0: i32, %arg1: i32) -> (i32, i32) {
    %c0_i32 = arith.constant 0 : i32
    return %arg1, %arg0 : i32, i32
  }
  func.func @transform_1(%arg0: i32, %arg1: i32) -> (i32, i32) {
    %c0_i32 = arith.constant 0 : i32
    %c0_i32_0 = arith.constant 0 : i32
    return %c0_i32, %arg0 : i32, i32
  }
  func.func @transform_2(%arg0: i32, %arg1: i32) -> (i32, i32) {
    %c0_i32 = arith.constant 0 : i32
    %c0_i32_0 = arith.constant 0 : i32
    return %arg1, %c0_i32 : i32, i32
  }
  func.func @transform_3(%arg0: i32, %arg1: i32) -> (i32, i32) {
    %c0_i32 = arith.constant 0 : i32
    %c0_i32_0 = arith.constant 0 : i32
    return %c0_i32, %arg0 : i32, i32
  }
  func.func @transform_4(%arg0: i32, %arg1: i32) -> (i32, i32) {
    %c0_i32 = arith.constant 0 : i32
    %c0_i32_0 = arith.constant 0 : i32
    return %c0_i32, %arg0 : i32, i32
  }
}

</mosaic_0001>

<llo_original>
// kernel: tpu_custom_call.1
$region0: #{tpu_custom_call.1}
  #allocation0 [shape = 'u32[]', space=smem, size = 0x4, offset = 0x4, fixed_abs, tag = 'smem constant byte address 0x4 - core index']
  #allocation1 [shape = 'u32[144,128]{1,0:T(1,128)}', space=vmem, size = 0x12000, scoped, tag = 'internal scratch']
  #allocation2 [shape = 'f32[1,256]{1,0:T(1,128)}', space=vmem, size = 0x400, scoped, tag = 'scratch operand']
  %s0 = inlined_call_operand.hbm [shape: f32[384,512], index: 0, kind: input, shape index: {}]
  %s1 = inlined_call_operand.vmem [shape: f32[16,512], index: 1, kind: input, shape index: {}]
  %s2 = inlined_call_operand.vmem [shape: f32[384,16], index: 2, kind: input, shape index: {}]
  %s3 = inlined_call_operand.vmem [shape: f32[1,512], index: 3, kind: input, shape index: {}]
  %s4 = inlined_call_operand.hbm [shape: f32[1,512], index: 4, kind: output, shape index: {}]
  %s5 = sld [smem:[#allocation0]]
  $region84: #{tpu_custom_call.1} parent=0
    _
  %s7 = ssub.s32 1, %s5
  %s8 = scalar_select 0, %s7, %s5
  $region1: #{tpu_custom_call.1} parent=0
    #allocation3 [shape = 'u8[262144]{0}', space=vmem, size = 0x40000, scoped, tag = 'input window, operand 0']
    #allocation4 [shape = 's32[2]{0}', space=sflag, size = 0x8, scoped, tag = 'scoped memory for tpu_custom_call.1']
    #allocation5 [shape = 's32[2]{0}', space=sflag, size = 0x8, scoped, tag = 'scoped memory for tpu_custom_call.1']
    #allocation6 [shape = 'u8[32768]{0}', space=vmem, size = 0x8000, scoped, tag = 'input window, operand 1']
    #allocation7 [shape = 'u8[2048]{0}', space=vmem, size = 0x800, scoped, tag = 'output window, operand 0']
    %9 = vsyncpa [#allocation4], 0
    %s10 = scalar_lea.sflag [#allocation4], 1
    %11 = vsyncpa %s10, 0
    %12 = vsyncpa [#allocation5], 0
    %s13 = scalar_lea.sflag [#allocation5], 1
    %14 = vsyncpa %s13, 0
    loop: start=0, step=1, limit=8
    $region2: #{tpu_custom_call.1} parent=1 // loop_pre_header
      _
    $region3: #{tpu_custom_call.1} parent=1 // loop_header
      %s16 = sphi 0, %s20
      %p17 = scmp.ge.s32.totalorder %s16, 8
      %s23 = sphi 0, %s35
      %s24 = sphi 0, %s31
      %s25 = sphi 0, %s23
      %s26 = sphi 0, %s24
      %s27 = sphi 0, %s25
      %s28 = sphi 0, %s26
      %s40 = sphi 0, %s42
      %s43 = sphi 0, %s40
      %s44 = sphi 0, %s43
      %s60 = sphi 0, %s44
      %s66 = sphi 0, %s68
      %s69 = sphi 0, %s66
      %s70 = sphi 0, %s69
      %s86 = sphi 0, %s70
      %s92 = sphi 0, %s94
      %s95 = sphi 0, %s92
      %s96 = sphi 0, %s95
      %s112 = sphi 0, %s96
      %s118 = sphi 0, %s120
      %s121 = sphi 0, %s118
      %s122 = sphi 0, %s121
      %s138 = sphi 0, %s122
      %s144 = sphi 0, %s146
      %s147 = sphi 0, %s144
      %s148 = sphi 0, %s147
      %s164 = sphi 0, %s148
    $region4: #{tpu_custom_call.1} parent=1 // loop_header_branch
      %19 = sbr.rel (%p17) target = $region8
    $region5: #{tpu_custom_call.1} parent=1 // loop_body
      %s21 = ssub.s32 %s16, 1
      %s22 = ssub.s32 %s16, 2
      %s29 = sadd.s32 1, %s24
      %p30 = scmp.ge.s32.totalorder %s29, 3
      %s31 = scalar_select %p30, 0, %s29
      %s32 = sadd.s32 1, %s23
      %s33 = scalar_select %p30, %s32, %s23
      %p34 = scmp.ge.s32.totalorder %s33, 2
      %s35 = scalar_select %p34, 0, %s33
      %s36 = ssub.s32 %s24, %s31
      %s37 = ssub.s32 %s23, %s35
      %s38 = sor.u32 %s36, %s37
      %p39 = scmp.eq.s32.totalorder %s38, 0
      %s41 = sadd.s32 %s40, 1
      %s42 = scalar_select %p39, %s40, %s41
      %p45 = pneg %p39
      %p46 = scmp.eq.s32.totalorder %s16, 5
      %p47 = por %p45, %p46
      %p48 = scmp.ne.s32.totalorder %s40, %s43
      %p49 = scmp.eq.s32.totalorder %s16, 0
      %p50 = por %p48, %p49
      %p51 = scmp.ne.s32.totalorder %s40, %s43
      %p52 = scmp.eq.s32.totalorder %s21, 5
      %p53 = por %p51, %p52
      %p54 = scmp.ne.s32.totalorder %s43, %s44
      %p55 = scmp.eq.s32.totalorder %s21, 0
      %p56 = por %p54, %p55
      %p57 = scmp.ne.s32.totalorder %s43, %s44
      %p58 = scmp.eq.s32.totalorder %s22, 5
      %p59 = por %p57, %p58
      %p61 = scmp.ne.s32.totalorder %s44, %s60
      %p62 = scmp.eq.s32.totalorder %s22, 0
      %p63 = por %p61, %p62
      %s64 = ssub.s32 %s23, %s35
      %p65 = scmp.eq.s32.totalorder %s64, 0
      %s67 = sadd.s32 %s66, 1
      %s68 = scalar_select %p65, %s66, %s67
      %p71 = pneg %p65
      %p72 = scmp.eq.s32.totalorder %s16, 5
      %p73 = por %p71, %p72
      %p74 = scmp.ne.s32.totalorder %s66, %s69
      %p75 = scmp.eq.s32.totalorder %s16, 0
      %p76 = por %p74, %p75
      %p77 = scmp.ne.s32.totalorder %s66, %s69
      %p78 = scmp.eq.s32.totalorder %s21, 5
      %p79 = por %p77, %p78
      %p80 = scmp.ne.s32.totalorder %s69, %s70
      %p81 = scmp.eq.s32.totalorder %s21, 0
      %p82 = por %p80, %p81
      %p83 = scmp.ne.s32.totalorder %s69, %s70
      %p84 = scmp.eq.s32.totalorder %s22, 5
      %p85 = por %p83, %p84
      %p87 = scmp.ne.s32.totalorder %s70, %s86
      %p88 = scmp.eq.s32.totalorder %s22, 0
      %p89 = por %p87, %p88
      %s90 = ssub.s32 %s24, %s31
      %p91 = scmp.eq.s32.totalorder %s90, 0
      %s93 = sadd.s32 %s92, 1
      %s94 = scalar_select %p91, %s92, %s93
      %p97 = pneg %p91
      %p98 = scmp.eq.s32.totalorder %s16, 5
      %p99 = por %p97, %p98
      %p100 = scmp.ne.s32.totalorder %s92, %s95
      %p101 = scmp.eq.s32.totalorder %s16, 0
      %p102 = por %p100, %p101
      %p103 = scmp.ne.s32.totalorder %s92, %s95
      %p104 = scmp.eq.s32.totalorder %s21, 5
      %p105 = por %p103, %p104
      %p106 = scmp.ne.s32.totalorder %s95, %s96
      %p107 = scmp.eq.s32.totalorder %s21, 0
      %p108 = por %p106, %p107
      %p109 = scmp.ne.s32.totalorder %s95, %s96
      %p110 = scmp.eq.s32.totalorder %s22, 5
      %p111 = por %p109, %p110
      %p113 = scmp.ne.s32.totalorder %s96, %s112
      %p114 = scmp.eq.s32.totalorder %s22, 0
      %p115 = por %p113, %p114
      %s116 = ssub.s32 %s23, %s35
      %p117 = scmp.eq.s32.totalorder %s116, 0
      %s119 = sadd.s32 %s118, 1
      %s120 = scalar_select %p117, %s118, %s119
      %p123 = pneg %p117
      %p124 = scmp.eq.s32.totalorder %s16, 5
      %p125 = por %p123, %p124
      %p126 = scmp.ne.s32.totalorder %s118, %s121
      %p127 = scmp.eq.s32.totalorder %s16, 0
      %p128 = por %p126, %p127
      %p129 = scmp.ne.s32.totalorder %s118, %s121
      %p130 = scmp.eq.s32.totalorder %s21, 5
      %p131 = por %p129, %p130
      %p132 = scmp.ne.s32.totalorder %s121, %s122
      %p133 = scmp.eq.s32.totalorder %s21, 0
      %p134 = por %p132, %p133
      %p135 = scmp.ne.s32.totalorder %s121, %s122
      %p136 = scmp.eq.s32.totalorder %s22, 5
      %p137 = por %p135, %p136
      %p139 = scmp.ne.s32.totalorder %s122, %s138
      %p140 = scmp.eq.s32.totalorder %s22, 0
      %p141 = por %p139, %p140
      %s142 = ssub.s32 %s23, %s35
      %p143 = scmp.eq.s32.totalorder %s142, 0
      %s145 = sadd.s32 %s144, 1
      %s146 = scalar_select %p143, %s144, %s145
      %p149 = pneg %p143
      %p150 = scmp.eq.s32.totalorder %s16, 5
      %p151 = por %p149, %p150
      %p152 = scmp.ne.s32.totalorder %s144, %s147
      %p153 = scmp.eq.s32.totalorder %s16, 0
      %p154 = por %p152, %p153
      %p155 = scmp.ne.s32.totalorder %s144, %s147
      %p156 = scmp.eq.s32.totalorder %s21, 5
      %p157 = por %p155, %p156
      %p158 = scmp.ne.s32.totalorder %s147, %s148
      %p159 = scmp.eq.s32.totalorder %s21, 0
      %p160 = por %p158, %p159
      %p161 = scmp.ne.s32.totalorder %s147, %s148
      %p162 = scmp.eq.s32.totalorder %s22, 5
      %p163 = por %p161, %p162
      %p165 = scmp.ne.s32.totalorder %s148, %s164
      %p166 = scmp.eq.s32.totalorder %s22, 0
      %p167 = por %p165, %p166
      %p168 = scmp.le.s32.totalorder 1, %s16
      %p169 = scmp.lt.s32.totalorder %s16, 7
      %p170 = pnand %p168, %p169
      %p171 = pneg %p170
      // Predicated region
      $region9: #{tpu_custom_call.1} parent=5 // pred_check
        _
      $region10: #{tpu_custom_call.1} parent=5 // pred_check_branch
        %173 = sbr.rel (%p170) target = $region12
      $region11: #{tpu_custom_call.1} parent=5 // pred_region
        %s174 = ssub.s32 %s16, 1
      $region12: #{tpu_custom_call.1} parent=5 // pred_fallthru
        _
      %p175 = scmp.lt.s32.totalorder %s16, 6
      // Predicated region
      $region13: #{tpu_custom_call.1} parent=5 // pred_check
        %p176 = pneg %p175
      $region14: #{tpu_custom_call.1} parent=5 // pred_check_branch
        %178 = sbr.rel (%p176) target = $region16
      $region15: #{tpu_custom_call.1} parent=5 // pred_region
        // Predicated region
        $region17: #{tpu_custom_call.1} parent=15 // pred_check
          %p179 = pneg %p50
        $region18: #{tpu_custom_call.1} parent=15 // pred_check_branch
          %181 = sbr.rel (%p179) target = $region20
        $region19: #{tpu_custom_call.1} parent=15 // pred_region
          %s182 = sand.u32 %s40, 1
          %s183 = scalar_lea.sflag [#allocation4], %s182
          %s184 = sand.u32 %s40, 1
          %s185 = smul.addr %s184, 256
          %s186 = scalar_lea.vmem [#allocation3], %s185
          %s187 = smul.u32 16, %s24
          %s188 = smul.u32 2, %s23
          %s190 = ssub.s32 4096, 4096
          %191 = vsyncadd %s183, %s190
          %s192 = smul.addr %s187, 4
          %s193 = sadd.s32 %s188, %s192
          %s194 = smul.addr %s193, 128
          %s195 = scalar_lea.hbm %s0, %s194
          %s196 = sshll.u32 %s186, 4
          %s197 = int_to_ptr.vmem [resolvable:$true] %s196
          %202 = dma.hbm_to_vmem [thread:$0]  %s195, 4096, %s197, %s183, 512, 256, 16
        $region20: #{tpu_custom_call.1} parent=15 // pred_fallthru
          _
        // Predicated region
        $region21: #{tpu_custom_call.1} parent=15 // pred_check
          %p203 = pneg %p76
        $region22: #{tpu_custom_call.1} parent=15 // pred_check_branch
          %205 = sbr.rel (%p203) target = $region24
        $region23: #{tpu_custom_call.1} parent=15 // pred_region
          %s206 = sand.u32 %s66, 1
          %s207 = sand.u32 %s66, 1
          %s208 = smul.addr %s207, 32
          %s209 = scalar_lea.vmem [#allocation6], %s208
          %s210 = smul.u32 2, %s23
          %s211 = smul.addr %s210, 8
          %s212 = scalar_lea.vmem %s1, %s211
          // Predicated region
          $region25: #{tpu_custom_call.1} parent=23 // pred_check
            _
          $region26: #{tpu_custom_call.1} parent=23 // pred_check_branch
            %214 = sbr.rel (0) target = $region28
          $region27: #{tpu_custom_call.1} parent=23 // pred_region
            // Predicated region
            $region29: #{tpu_custom_call.1} parent=27 // pred_check
              _
            $region30: #{tpu_custom_call.1} parent=27 // pred_check_branch
              %216 = sbr.rel (0) target = $region32
            $region31: #{tpu_custom_call.1} parent=27 // pred_region
              loop: start=0, step=1, limit=1
              $region33: #{tpu_custom_call.1} parent=31 // loop_pre_header
                _
              $region34: #{tpu_custom_call.1} parent=31 // loop_header
                %s218 = sphi 0, %s222
                %p219 = scmp.ge.s32.totalorder %s218, 1
                %s223 = sphi %s212, %s212
                %s224 = sphi %s209, %s209
              $region35: #{tpu_custom_call.1} parent=31 // loop_header_branch
                %221 = sbr.rel (%p219) target = $region39
              $region36: #{tpu_custom_call.1} parent=31 // loop_body
                %v225 = vld [vmem:[%s223] sm:$0xff]
                %226 = vst [vmem:[%s224] sm:$0xff] %v225
                %v227 = vld [vmem:[%s223 + $0x8] sm:$0xff]
                %228 = vst [vmem:[%s224 + $0x8] sm:$0xff] %v227
                %v229 = vld [vmem:[%s223 + $0x20] sm:$0xff]
                %230 = vst [vmem:[%s224 + $0x10] sm:$0xff] %v229
                %v231 = vld [vmem:[%s223 + $0x28] sm:$0xff]
                %232 = vst [vmem:[%s224 + $0x18] sm:$0xff] %v231
              $region37: #{tpu_custom_call.1} parent=31 // loop_footer
                %s222 = sadd.s32 1, %s218
              $region38: #{tpu_custom_call.1} parent=31 // loop_footer_branch
                %217 = sbr.rel target = $region34
              $region39: #{tpu_custom_call.1} parent=31 // loop_exit
                _
            $region32: #{tpu_custom_call.1} parent=27 // pred_fallthru
              _
            // Predicated region
            $region40: #{tpu_custom_call.1} parent=27 // pred_check
              _
            $region41: #{tpu_custom_call.1} parent=27 // pred_check_branch
              %234 = sbr.rel target = $region43
            $region42: #{tpu_custom_call.1} parent=27 // pred_region
              _
            $region43: #{tpu_custom_call.1} parent=27 // pred_fallthru
              _
          $region28: #{tpu_custom_call.1} parent=23 // pred_fallthru
            _
          %235 = vnop
        $region24: #{tpu_custom_call.1} parent=15 // pred_fallthru
          _
        // Predicated region
        $region44: #{tpu_custom_call.1} parent=15 // pred_check
          %p236 = pneg %p102
        $region45: #{tpu_custom_call.1} parent=15 // pred_check_branch
          %238 = sbr.rel (%p236) target = $region47
        $region46: #{tpu_custom_call.1} parent=15 // pred_region
          %s239 = smul.u32 16, %s24
          %p240 = scmp.lt.s32.totalorder %s239, 47
          %s241 = scalar_select %p240, %s239, 47
          %s242 = smul.addr %s241, 8
          %s243 = scalar_lea.vmem %s2, %s242
          %s244 = smul.u32 16, %s24
        $region47: #{tpu_custom_call.1} parent=15 // pred_fallthru
          _
        // Predicated region
        $region48: #{tpu_custom_call.1} parent=15 // pred_check
          %p245 = pneg %p128
        $region49: #{tpu_custom_call.1} parent=15 // pred_check_branch
          %247 = sbr.rel (%p245) target = $region51
        $region50: #{tpu_custom_call.1} parent=15 // pred_region
          %s248 = smul.u32 2, %s23
          %p249 = scmp.lt.s32.totalorder %s248, 3
          %s250 = scalar_select %p249, %s248, 3
          %s251 = scalar_lea.vmem %s3, %s250
          %s252 = smul.u32 2, %s23
        $region51: #{tpu_custom_call.1} parent=15 // pred_fallthru
          _
      $region16: #{tpu_custom_call.1} parent=5 // pred_fallthru
        _
      %p253 = scmp.le.s32.totalorder 1, %s16
      %p254 = scmp.lt.s32.totalorder %s16, 7
      %p255 = pnand %p253, %p254
      %p256 = pneg %p255
      // Predicated region
      $region52: #{tpu_custom_call.1} parent=5 // pred_check
        _
      $region53: #{tpu_custom_call.1} parent=5 // pred_check_branch
        %258 = sbr.rel (%p255) target = $region55
      $region54: #{tpu_custom_call.1} parent=5 // pred_region
        %s259 = ssub.s32 %s16, 1
        %s260 = sand.u32 %s43, 1
        %s261 = scalar_lea.sflag [#allocation4], %s260
        %s262 = sand.u32 %s43, 1
        %s263 = smul.addr %s262, 256
        %s264 = scalar_lea.vmem [#allocation3], %s263
        // Predicated region
        $region56: #{tpu_custom_call.1} parent=54 // pred_check
          %p265 = pneg %p56
        $region57: #{tpu_custom_call.1} parent=54 // pred_check_branch
          %267 = sbr.rel (%p265) target = $region59
        $region58: #{tpu_custom_call.1} parent=54 // pred_region
          %268 = dma.done %s261, 4096
        $region59: #{tpu_custom_call.1} parent=54 // pred_fallthru
          _
        %s269 = sand.u32 %s69, 1
        %s270 = sand.u32 %s69, 1
        %s271 = smul.addr %s270, 32
        %s272 = scalar_lea.vmem [#allocation6], %s271
        // Predicated region
        $region60: #{tpu_custom_call.1} parent=54 // pred_check
          %p273 = pneg %p82
        $region61: #{tpu_custom_call.1} parent=54 // pred_check_branch
          %275 = sbr.rel (%p273) target = $region63
        $region62: #{tpu_custom_call.1} parent=54 // pred_region
          _
        $region63: #{tpu_custom_call.1} parent=54 // pred_fallthru
          _
        %s276 = sand.u32 %s43, 1
        %s277 = scalar_lea.sflag [#allocation4], %s276
        %s278 = sand.u32 %s43, 1
        %s279 = smul.addr %s278, 256
        %s280 = scalar_lea.vmem [#allocation3], %s279
        %p281 = pneg %p56
        %p282 = pneg %p53
        %s283 = sand.u32 %s69, 1
        %s284 = sand.u32 %s69, 1
        %s285 = smul.addr %s284, 32
        %s286 = scalar_lea.vmem [#allocation6], %s285
        %p287 = pneg %p82
        %p288 = pneg %p79
        %s289 = smul.u32 16, %s26
        %p290 = scmp.lt.s32.totalorder %s289, 47
        %s291 = scalar_select %p290, %s289, 47
        %s292 = smul.addr %s291, 8
        %s293 = scalar_lea.vmem %s2, %s292
        %p294 = pneg %p108
        %p295 = pneg %p105
        %s296 = smul.u32 2, %s25
        %p297 = scmp.lt.s32.totalorder %s296, 3
        %s298 = scalar_select %p297, %s296, 3
        %s299 = scalar_lea.vmem %s3, %s298
        %p300 = pneg %p134
        %p301 = pneg %p131
        %p302 = pneg %p160
        %p303 = pneg %p157
        %s304 = sand.u32 %s147, 1
        %s305 = scalar_lea.sflag [#allocation5], %s304
        %s306 = sand.u32 %s147, 1
        %s307 = smul.addr %s306, 2
        %s308 = scalar_lea.vmem [#allocation7], %s307
        %s309 = smul.u32 16, %s26
        %s310 = smul.u32 2, %s25
        %s311 = smul.u32 2, %s25
        %s312 = smul.u32 16, %s26
        %p313 = scmp.lt.s32.totalorder %s312, 47
        %s314 = scalar_select %p313, %s312, 47
        %s315 = smul.addr %s314, 8
        %s316 = scalar_lea.vmem %s2, %s315
        %s317 = smul.u32 16, %s26
        %s318 = smul.u32 2, %s25
        %p319 = scmp.lt.s32.totalorder %s318, 3
        %s320 = scalar_select %p319, %s318, 3
        %s321 = scalar_lea.vmem %s3, %s320
        %s322 = smul.u32 2, %s25
        %s323 = smul.u32 2, %s25
        %p324 = scmp.eq.s32.totalorder %s26, 0
        // Predicated region
        $region64: #{tpu_custom_call.1} parent=54 // pred_check
          %p325 = pneg %p324
        $region65: #{tpu_custom_call.1} parent=54 // pred_check_branch
          %327 = sbr.rel (%p325) target = $region67
        $region66: #{tpu_custom_call.1} parent=54 // pred_region
          %v328 = vlaneseq
          %vm329 = vcmp.ge.s32.totalorder %v328, 0
          %vm330 = vcmp.lt.s32.totalorder %v328, 256
          %vm331 = vmand %vm329, %vm330
          %332 = vst.msk [vmem:[#allocation2] sm:$0x3] %vm331, 0.0
        $region67: #{tpu_custom_call.1} parent=54 // pred_fallthru
          _
        %v333 = vld [vmem:[%s316] sm:$0xff]
        %v334 = vld [vmem:[%s316 + $0x8] sm:$0xff]
        %v335 = vld [vmem:[%s316 + $0x10] sm:$0xff]
        %v336 = vld [vmem:[%s316 + $0x18] sm:$0xff]
        %v337 = vld [vmem:[%s316 + $0x20] sm:$0xff]
        %v338 = vld [vmem:[%s316 + $0x28] sm:$0xff]
        %v339 = vld [vmem:[%s316 + $0x30] sm:$0xff]
        %v340 = vld [vmem:[%s316 + $0x38] sm:$0xff]
        %v341 = vld [vmem:[%s316 + $0x40] sm:$0xff]
        %v342 = vld [vmem:[%s316 + $0x48] sm:$0xff]
        %v343 = vld [vmem:[%s316 + $0x50] sm:$0xff]
        %v344 = vld [vmem:[%s316 + $0x58] sm:$0xff]
        %v345 = vld [vmem:[%s316 + $0x60] sm:$0xff]
        %v346 = vld [vmem:[%s316 + $0x68] sm:$0xff]
        %v347 = vld [vmem:[%s316 + $0x70] sm:$0xff]
        %v348 = vld [vmem:[%s316 + $0x78] sm:$0xff]
        %v349 = vld [vmem:[%s272] sm:$0xff]
        %v350 = vld [vmem:[%s272 + $0x8] sm:$0xff]
        %v351 = vld [vmem:[%s272 + $0x10] sm:$0xff]
        %v352 = vld [vmem:[%s272 + $0x18] sm:$0xff]
        %vm353 = vcmask 130048
        %v355 = vsel %vm353, %v333, 0
        %v358 = vsel %vm353, %v334, 0
        %v361 = vsel %vm353, %v335, 0
        %v364 = vsel %vm353, %v336, 0
        %v367 = vsel %vm353, %v337, 0
        %v370 = vsel %vm353, %v338, 0
        %v373 = vsel %vm353, %v339, 0
        %v376 = vsel %vm353, %v340, 0
        %v379 = vsel %vm353, %v341, 0
        %v382 = vsel %vm353, %v342, 0
        %v385 = vsel %vm353, %v343, 0
        %v388 = vsel %vm353, %v344, 0
        %v391 = vsel %vm353, %v345, 0
        %v394 = vsel %vm353, %v346, 0
        %v397 = vsel %vm353, %v347, 0
        %v400 = vsel %vm353, %v348, 0
        %402 = vmatprep.subr.mxu0 %v350
        %403 = vmatpush1.msra.mxu0 %v349
        %404 = vmatprep.subr.mxu0 %v352
        %405 = vmatpush1.msra.mxu0 %v351
        %406 = vmatprep.subr.mxu0 0.0
        %407 = vmatpush1.msra.mxu0 0.0
        %408 = vmatprep.subr.mxu0 0.0
        %409 = vmatpush1.msra.mxu0 0.0
        %410 = vmatprep.subr.mxu0 0.0
        %411 = vmatpush1.msra.mxu0 0.0
        %412 = vmatprep.subr.mxu0 0.0
        %413 = vmatpush1.msra.mxu0 0.0
        %414 = vmatprep.subr.mxu0 0.0
        %415 = vmatpush1.msra.mxu0 0.0
        %416 = vmatprep.subr.mxu0 0.0
        %417 = vmatpush1.msra.mxu0 0.0
        %418 = vmatprep.subr.mxu0 0.0
        %419 = vmatpush1.msra.mxu0 0.0
        %420 = vmatprep.subr.mxu0 0.0
        %421 = vmatpush1.msra.mxu0 0.0
        %422 = vmatprep.subr.mxu0 0.0
        %423 = vmatpush1.msra.mxu0 0.0
        %424 = vmatprep.subr.mxu0 0.0
        %425 = vmatpush1.msra.mxu0 0.0
        %426 = vmatprep.subr.mxu0 0.0
        %427 = vmatpush1.msra.mxu0 0.0
        %428 = vmatprep.subr.mxu0 0.0
        %429 = vmatpush1.msra.mxu0 0.0
        %430 = vmatprep.subr.mxu0 0.0
        %431 = vmatpush1.msra.mxu0 0.0
        %432 = vmatprep.subr.mxu0 0.0
        %433 = vmatpush1.msra.mxu0 0.0
        %434 = vmatprep.subr.mxu0 0.0
        %435 = vmatpush1.msra.mxu0 0.0
        %436 = vmatprep.subr.mxu0 0.0
        %437 = vmatpush1.msra.mxu0 0.0
        %438 = vmatprep.subr.mxu0 0.0
        %439 = vmatpush1.msra.mxu0 0.0
        %440 = vmatprep.subr.mxu0 0.0
        %441 = vmatpush1.msra.mxu0 0.0
        %442 = vmatprep.subr.mxu0 0.0
        %443 = vmatpush1.msra.mxu0 0.0
        %444 = vmatprep.subr.mxu0 0.0
        %445 = vmatpush1.msra.mxu0 0.0
        %446 = vmatprep.subr.mxu0 0.0
        %447 = vmatpush1.msra.mxu0 0.0
        %448 = vmatprep.subr.mxu0 0.0
        %449 = vmatpush1.msra.mxu0 0.0
        %450 = vmatprep.subr.mxu0 0.0
        %451 = vmatpush1.msra.mxu0 0.0
        %452 = vmatprep.subr.mxu0 0.0
        %453 = vmatpush1.msra.mxu0 0.0
        %454 = vmatprep.subr.mxu0 0.0
        %455 = vmatpush1.msra.mxu0 0.0
        %456 = vmatprep.subr.mxu0 0.0
        %457 = vmatpush1.msra.mxu0 0.0
        %458 = vmatprep.subr.mxu0 0.0
        %459 = vmatpush1.msra.mxu0 0.0
        %460 = vmatprep.subr.mxu0 0.0
        %461 = vmatpush1.msra.mxu0 0.0
        %462 = vmatprep.subr.mxu0 0.0
        %463 = vmatpush1.msra.mxu0 0.0
        %464 = vmatprep.subr.mxu0 0.0
        %465 = vmatpush1.msra.mxu0 0.0
        %466 = vmatprep.mubr.f32.mxu0 0.0
        %467 = vmatmul.mubr.f32.gmra.mrb[0].mxu0 %v355
        %v468 = vpop.f32.mrb[0].mxu0
        %v469 = vadd.f32 0.0, %v468
        %v470 = vpop.f32.mrb[0].mxu0
        %v471 = vadd.f32 0.0, %v470
        %472 = vmatprep.mubr.f32.mxu0 0.0
        %473 = vmatmul.mubr.f32.gmra.mrb[0].mxu0 %v358
        %v474 = vpop.f32.mrb[0].mxu0
        %v475 = vadd.f32 0.0, %v474
        %v476 = vpop.f32.mrb[0].mxu0
        %v477 = vadd.f32 0.0, %v476
        %478 = vmatprep.mubr.f32.mxu0 0.0
        %479 = vmatmul.mubr.f32.gmra.mrb[0].mxu0 %v361
        %v480 = vpop.f32.mrb[0].mxu0
        %v481 = vadd.f32 0.0, %v480
        %v482 = vpop.f32.mrb[0].mxu0
        %v483 = vadd.f32 0.0, %v482
        %484 = vmatprep.mubr.f32.mxu0 0.0
        %485 = vmatmul.mubr.f32.gmra.mrb[0].mxu0 %v364
        %v486 = vpop.f32.mrb[0].mxu0
        %v487 = vadd.f32 0.0, %v486
        %v488 = vpop.f32.mrb[0].mxu0
        %v489 = vadd.f32 0.0, %v488
        %490 = vmatprep.mubr.f32.mxu0 0.0
        %491 = vmatmul.mubr.f32.gmra.mrb[0].mxu0 %v367
        %v492 = vpop.f32.mrb[0].mxu0
        %v493 = vadd.f32 0.0, %v492
        %v494 = vpop.f32.mrb[0].mxu0
        %v495 = vadd.f32 0.0, %v494
        %496 = vmatprep.mubr.f32.mxu0 0.0
        %497 = vmatmul.mubr.f32.gmra.mrb[0].mxu0 %v370
        %v498 = vpop.f32.mrb[0].mxu0
        %v499 = vadd.f32 0.0, %v498
        %v500 = vpop.f32.mrb[0].mxu0
        %v501 = vadd.f32 0.0, %v500
        %502 = vmatprep.mubr.f32.mxu0 0.0
        %503 = vmatmul.mubr.f32.gmra.mrb[0].mxu0 %v373
        %v504 = vpop.f32.mrb[0].mxu0
        %v505 = vadd.f32 0.0, %v504
        %v506 = vpop.f32.mrb[0].mxu0
        %v507 = vadd.f32 0.0, %v506
        %508 = vmatprep.mubr.f32.mxu0 0.0
        %509 = vmatmul.mubr.f32.gmra.mrb[0].mxu0 %v376
        %v510 = vpop.f32.mrb[0].mxu0
        %v511 = vadd.f32 0.0, %v510
        %v512 = vpop.f32.mrb[0].mxu0
        %v513 = vadd.f32 0.0, %v512
        %514 = vmatprep.mubr.f32.mxu0 0.0
        %515 = vmatmul.mubr.f32.gmra.mrb[0].mxu0 %v379
        %v516 = vpop.f32.mrb[0].mxu0
        %v517 = vadd.f32 0.0, %v516
        %v518 = vpop.f32.mrb[0].mxu0
        %v519 = vadd.f32 0.0, %v518
        %520 = vmatprep.mubr.f32.mxu0 0.0
        %521 = vmatmul.mubr.f32.gmra.mrb[0].mxu0 %v382
        %v522 = vpop.f32.mrb[0].mxu0
        %v523 = vadd.f32 0.0, %v522
        %v524 = vpop.f32.mrb[0].mxu0
        %v525 = vadd.f32 0.0, %v524
        %526 = vmatprep.mubr.f32.mxu0 0.0
        %527 = vmatmul.mubr.f32.gmra.mrb[0].mxu0 %v385
        %v528 = vpop.f32.mrb[0].mxu0
        %v529 = vadd.f32 0.0, %v528
        %v530 = vpop.f32.mrb[0].mxu0
        %v531 = vadd.f32 0.0, %v530
        %532 = vmatprep.mubr.f32.mxu0 0.0
        %533 = vmatmul.mubr.f32.gmra.mrb[0].mxu0 %v388
        %v534 = vpop.f32.mrb[0].mxu0
        %v535 = vadd.f32 0.0, %v534
        %v536 = vpop.f32.mrb[0].mxu0
        %v537 = vadd.f32 0.0, %v536
        %538 = vmatprep.mubr.f32.mxu0 0.0
        %539 = vmatmul.mubr.f32.gmra.mrb[0].mxu0 %v391
        %v540 = vpop.f32.mrb[0].mxu0
        %v541 = vadd.f32 0.0, %v540
        %v542 = vpop.f32.mrb[0].mxu0
        %v543 = vadd.f32 0.0, %v542
        %544 = vmatprep.mubr.f32.mxu0 0.0
        %545 = vmatmul.mubr.f32.gmra.mrb[0].mxu0 %v394
        %v546 = vpop.f32.mrb[0].mxu0
        %v547 = vadd.f32 0.0, %v546
        %v548 = vpop.f32.mrb[0].mxu0
        %v549 = vadd.f32 0.0, %v548
        %550 = vmatprep.mubr.f32.mxu0 0.0
        %551 = vmatmul.mubr.f32.gmra.mrb[0].mxu0 %v397
        %v552 = vpop.f32.mrb[0].mxu0
        %v553 = vadd.f32 0.0, %v552
        %v554 = vpop.f32.mrb[0].mxu0
        %v555 = vadd.f32 0.0, %v554
        %556 = vmatprep.mubr.f32.mxu0 0.0
        %557 = vmatmul.mubr.f32.gmra.mrb[0].mxu0 %v400
        %v558 = vpop.f32.mrb[0].mxu0
        %v559 = vadd.f32 0.0, %v558
        %v560 = vpop.f32.mrb[0].mxu0
        %v561 = vadd.f32 0.0, %v560
        %562 = vdwg.mxu0
        %v563 = vmul.f32 %v469, 0.5
        %v564 = vmul.f32 %v471, 0.5
        %v565 = vmul.f32 %v475, 0.5
        %v566 = vmul.f32 %v477, 0.5
        %v567 = vmul.f32 %v481, 0.5
        %v568 = vmul.f32 %v483, 0.5
        %v569 = vmul.f32 %v487, 0.5
        %v570 = vmul.f32 %v489, 0.5
        %v571 = vmul.f32 %v493, 0.5
        %v572 = vmul.f32 %v495, 0.5
        %v573 = vmul.f32 %v499, 0.5
        %v574 = vmul.f32 %v501, 0.5
        %v575 = vmul.f32 %v505, 0.5
        %v576 = vmul.f32 %v507, 0.5
        %v577 = vmul.f32 %v511, 0.5
        %v578 = vmul.f32 %v513, 0.5
        %v579 = vmul.f32 %v517, 0.5
        %v580 = vmul.f32 %v519, 0.5
        %v581 = vmul.f32 %v523, 0.5
        %v582 = vmul.f32 %v525, 0.5
        %v583 = vmul.f32 %v529, 0.5
        %v584 = vmul.f32 %v531, 0.5
        %v585 = vmul.f32 %v535, 0.5
        %v586 = vmul.f32 %v537, 0.5
        %v587 = vmul.f32 %v541, 0.5
        %v588 = vmul.f32 %v543, 0.5
        %v589 = vmul.f32 %v547, 0.5
        %v590 = vmul.f32 %v549, 0.5
        %v591 = vmul.f32 %v553, 0.5
        %v592 = vmul.f32 %v555, 0.5
        %v593 = vmul.f32 %v559, 0.5
        %v594 = vmul.f32 %v561, 0.5
        %v595 = vld [vmem:[%s264] sm:$0xff]
        %v596 = vld [vmem:[%s264 + $0x8] sm:$0xff]
        %v597 = vld [vmem:[%s264 + $0x10] sm:$0xff]
        %v598 = vld [vmem:[%s264 + $0x18] sm:$0xff]
        %v599 = vld [vmem:[%s264 + $0x20] sm:$0xff]
        %v600 = vld [vmem:[%s264 + $0x28] sm:$0xff]
        %v601 = vld [vmem:[%s264 + $0x30] sm:$0xff]
        %v602 = vld [vmem:[%s264 + $0x38] sm:$0xff]
        %v603 = vld [vmem:[%s264 + $0x40] sm:$0xff]
        %v604 = vld [vmem:[%s264 + $0x48] sm:$0xff]
        %v605 = vld [vmem:[%s264 + $0x50] sm:$0xff]
        %v606 = vld [vmem:[%s264 + $0x58] sm:$0xff]
        %v607 = vld [vmem:[%s264 + $0x60] sm:$0xff]
        %v608 = vld [vmem:[%s264 + $0x68] sm:$0xff]
        %v609 = vld [vmem:[%s264 + $0x70] sm:$0xff]
        %v610 = vld [vmem:[%s264 + $0x78] sm:$0xff]
        %v611 = vld [vmem:[%s264 + $0x80] sm:$0xff]
        %v612 = vld [vmem:[%s264 + $0x88] sm:$0xff]
        %v613 = vld [vmem:[%s264 + $0x90] sm:$0xff]
        %v614 = vld [vmem:[%s264 + $0x98] sm:$0xff]
        %v615 = vld [vmem:[%s264 + $0xa0] sm:$0xff]
        %v616 = vld [vmem:[%s264 + $0xa8] sm:$0xff]
        %v617 = vld [vmem:[%s264 + $0xb0] sm:$0xff]
        %v618 = vld [vmem:[%s264 + $0xb8] sm:$0xff]
        %v619 = vld [vmem:[%s264 + $0xc0] sm:$0xff]
        %v620 = vld [vmem:[%s264 + $0xc8] sm:$0xff]
        %v621 = vld [vmem:[%s264 + $0xd0] sm:$0xff]
        %v622 = vld [vmem:[%s264 + $0xd8] sm:$0xff]
        %v623 = vld [vmem:[%s264 + $0xe0] sm:$0xff]
        %v624 = vld [vmem:[%s264 + $0xe8] sm:$0xff]
        %v625 = vld [vmem:[%s264 + $0xf0] sm:$0xff]
        %v626 = vld [vmem:[%s264 + $0xf8] sm:$0xff]
        %v627 = vadd.f32 %v595, %v563
        %v628 = vadd.f32 %v596, %v564
        %v629 = vadd.f32 %v597, %v565
        %v630 = vadd.f32 %v598, %v566
        %v631 = vadd.f32 %v599, %v567
        %v632 = vadd.f32 %v600, %v568
        %v633 = vadd.f32 %v601, %v569
        %v634 = vadd.f32 %v602, %v570
        %v635 = vadd.f32 %v603, %v571
        %v636 = vadd.f32 %v604, %v572
        %v637 = vadd.f32 %v605, %v573
        %v638 = vadd.f32 %v606, %v574
        %v639 = vadd.f32 %v607, %v575
        %v640 = vadd.f32 %v608, %v576
        %v641 = vadd.f32 %v609, %v577
        %v642 = vadd.f32 %v610, %v578
        %v643 = vadd.f32 %v611, %v579
        %v644 = vadd.f32 %v612, %v580
        %v645 = vadd.f32 %v613, %v581
        %v646 = vadd.f32 %v614, %v582
        %v647 = vadd.f32 %v615, %v583
        %v648 = vadd.f32 %v616, %v584
        %v649 = vadd.f32 %v617, %v585
        %v650 = vadd.f32 %v618, %v586
        %v651 = vadd.f32 %v619, %v587
        %v652 = vadd.f32 %v620, %v588
        %v653 = vadd.f32 %v621, %v589
        %v654 = vadd.f32 %v622, %v590
        %v655 = vadd.f32 %v623, %v591
        %v656 = vadd.f32 %v624, %v592
        %v657 = vadd.f32 %v625, %v593
        %v658 = vadd.f32 %v626, %v594
        %v659 = vld [vmem:[#allocation2] sm:$0x3]
        %v660 = vmul.f32 %v627, %v627
        %v661 = vmul.f32 %v628, %v628
        %v662 = vmul.f32 %v629, %v629
        %v663 = vmul.f32 %v630, %v630
        %v664 = vmul.f32 %v631, %v631
        %v665 = vmul.f32 %v632, %v632
        %v666 = vmul.f32 %v633, %v633
        %v667 = vmul.f32 %v634, %v634
        %v668 = vmul.f32 %v635, %v635
        %v669 = vmul.f32 %v636, %v636
        %v670 = vmul.f32 %v637, %v637
        %v671 = vmul.f32 %v638, %v638
        %v672 = vmul.f32 %v639, %v639
        %v673 = vmul.f32 %v640, %v640
        %v674 = vmul.f32 %v641, %v641
        %v675 = vmul.f32 %v642, %v642
        %v676 = vmul.f32 %v643, %v643
        %v677 = vmul.f32 %v644, %v644
        %v678 = vmul.f32 %v645, %v645
        %v679 = vmul.f32 %v646, %v646
        %v680 = vmul.f32 %v647, %v647
        %v681 = vmul.f32 %v648, %v648
        %v682 = vmul.f32 %v649, %v649
        %v683 = vmul.f32 %v650, %v650
        %v684 = vmul.f32 %v651, %v651
        %v685 = vmul.f32 %v652, %v652
        %v686 = vmul.f32 %v653, %v653
        %v687 = vmul.f32 %v654, %v654
        %v688 = vmul.f32 %v655, %v655
        %v689 = vmul.f32 %v656, %v656
        %v690 = vmul.f32 %v657, %v657
        %v691 = vmul.f32 %v658, %v658
        %v692 = vadd.f32 %v660, %v662
        %v693 = vadd.f32 %v692, %v664
        %v694 = vadd.f32 %v693, %v666
        %v695 = vadd.f32 %v694, %v668
        %v696 = vadd.f32 %v695, %v670
        %v697 = vadd.f32 %v696, %v672
        %v698 = vadd.f32 %v697, %v674
        %v699 = vadd.f32 %v698, %v676
        %v700 = vadd.f32 %v699, %v678
        %v701 = vadd.f32 %v700, %v680
        %v702 = vadd.f32 %v701, %v682
        %v703 = vadd.f32 %v702, %v684
        %v704 = vadd.f32 %v703, %v686
        %v705 = vadd.f32 %v704, %v688
        %v706 = vadd.f32 %v705, %v690
        %v707 = vrot.slane %v706, 4
        %v708 = vadd.f32 %v706, %v707
        %v709 = vrot.slane %v708, 2
        %v710 = vadd.f32 %v708, %v709
        %v711 = vrot.slane %v710, 1
        %v712 = vadd.f32 %v710, %v711
        %v713 = vadd.f32 %v661, %v663
        %v714 = vadd.f32 %v713, %v665
        %v715 = vadd.f32 %v714, %v667
        %v716 = vadd.f32 %v715, %v669
        %v717 = vadd.f32 %v716, %v671
        %v718 = vadd.f32 %v717, %v673
        %v719 = vadd.f32 %v718, %v675
        %v720 = vadd.f32 %v719, %v677
        %v721 = vadd.f32 %v720, %v679
        %v722 = vadd.f32 %v721, %v681
        %v723 = vadd.f32 %v722, %v683
        %v724 = vadd.f32 %v723, %v685
        %v725 = vadd.f32 %v724, %v687
        %v726 = vadd.f32 %v725, %v689
        %v727 = vadd.f32 %v726, %v691
        %v728 = vrot.slane %v727, 4
        %v729 = vadd.f32 %v727, %v728
        %v730 = vrot.slane %v729, 2
        %v731 = vadd.f32 %v729, %v730
        %v732 = vrot.slane %v731, 1
        %v733 = vadd.f32 %v731, %v732
        %v736 = vcombine.low %v712, %v733
        %v738 = vunpack.c.l.s4 1966171168
        %v739 = vunpack.c.0.s8 %v738
        %v740 = vlaneseq
        %v741 = vshrl.u32 %v740, 7
        %v742 = vsub.s32 %v739, %v741
        %v743 = vrot.slane %v736, %v742
        %v745 = vunpack.c.l.s4 1966171168
        %v746 = vunpack.c.0.s8 %v745
        %v747 = vlaneseq
        %v748 = vshrl.u32 %v747, 7
        %v749 = vsub.s32 %v746, %v748
        %v750 = vrot.slane %v743, %v749
        %v752 = vadd.f32 %v659, %v750
        %v753 = vlaneseq
        %vm754 = vcmp.ge.s32.totalorder %v753, 0
        %vm755 = vcmp.lt.s32.totalorder %v753, 256
        %vm756 = vmand %vm754, %vm755
        %757 = vst.msk [vmem:[#allocation2] sm:$0x3] %vm756, %v752
        %p758 = scmp.eq.s32.totalorder %s26, 2
        // Predicated region
        $region68: #{tpu_custom_call.1} parent=54 // pred_check
          %p759 = pneg %p758
        $region69: #{tpu_custom_call.1} parent=54 // pred_check_branch
          %761 = sbr.rel (%p759) target = $region71
        $region70: #{tpu_custom_call.1} parent=54 // pred_region
          %v762 = vld [vmem:[#allocation2] sm:$0x3]
          %v763 = vrsqrt.pop %v762
          %v764 = vmul.f32 %v762, %v763
          %vm765 = vcmp.eq.f32.partialorder %v762, inf
          %v766 = vsel %vm765, %v762, %v764
          %vm767 = vcmp.eq.f32.partialorder %v762, 0.0
          %v768 = vand.u32 %v762, 2147483648
          %v769 = vsel %vm767, %v768, %v766
          %v770 = vadd.f32 %v769, 0.0
          %v771 = vld [vmem:[%s321] sm:$0x3]
          %v772 = vrcp.pop %v770
          %v773 = vmul.f32 %v771, %v772
          %774 = vst.msk [vmem:[%s308] sm:$0x3] %vm756, %v773
        $region71: #{tpu_custom_call.1} parent=54 // pred_fallthru
          _
        %s775 = sand.u32 %s147, 1
        %s776 = scalar_lea.sflag [#allocation5], %s775
        %s777 = sand.u32 %s147, 1
        %s778 = smul.addr %s777, 2
        %s779 = scalar_lea.vmem [#allocation7], %s778
        // Predicated region
        $region72: #{tpu_custom_call.1} parent=54 // pred_check
          %p780 = pneg %p157
        $region73: #{tpu_custom_call.1} parent=54 // pred_check_branch
          %782 = sbr.rel (%p780) target = $region75
        $region74: #{tpu_custom_call.1} parent=54 // pred_region
          %s783 = smul.u32 2, %s25
          %s785 = ssub.s32 32, 32
          %786 = vsyncadd %s776, %s785
          %s787 = smul.addr %s783, 16
          %s788 = scalar_lea.hbm %s4, %s787
          %s790 = sshll.u32 %s779, 4
          %s791 = int_to_ptr.vmem [resolvable:$true] %s790
          %793 = dma.vmem_to_hbm [thread:$0]  %s791, 32, %s788, %s776
        $region75: #{tpu_custom_call.1} parent=54 // pred_fallthru
          _
      $region55: #{tpu_custom_call.1} parent=5 // pred_fallthru
        _
      %p794 = scmp.le.s32.totalorder 2, %s16
      // Predicated region
      $region76: #{tpu_custom_call.1} parent=5 // pred_check
        %p795 = pneg %p794
      $region77: #{tpu_custom_call.1} parent=5 // pred_check_branch
        %797 = sbr.rel (%p795) target = $region79
      $region78: #{tpu_custom_call.1} parent=5 // pred_region
        %s798 = ssub.s32 %s16, 2
        // Predicated region
        $region80: #{tpu_custom_call.1} parent=78 // pred_check
          %p799 = pneg %p163
        $region81: #{tpu_custom_call.1} parent=78 // pred_check_branch
          %801 = sbr.rel (%p799) target = $region83
        $region82: #{tpu_custom_call.1} parent=78 // pred_region
          %s802 = sand.u32 %s148, 1
          %s803 = scalar_lea.sflag [#allocation5], %s802
          %s804 = sand.u32 %s148, 1
          %s805 = smul.addr %s804, 2
          %s806 = scalar_lea.vmem [#allocation7], %s805
          %807 = dma.done %s803, 32
        $region83: #{tpu_custom_call.1} parent=78 // pred_fallthru
          _
      $region79: #{tpu_custom_call.1} parent=5 // pred_fallthru
        _
    $region6: #{tpu_custom_call.1} parent=1 // loop_footer
      %s20 = sadd.s32 1, %s16
    $region7: #{tpu_custom_call.1} parent=1 // loop_footer_branch
      %15 = sbr.rel target = $region3
    $region8: #{tpu_custom_call.1} parent=1 // loop_exit
      _
    %808 = vsyncpa [#allocation4], 1
    %s809 = scalar_lea.sflag [#allocation4], 1
    %810 = vsyncpa %s809, 1
    %811 = vsyncpa [#allocation5], 1
    %s812 = scalar_lea.sflag [#allocation5], 1
    %813 = vsyncpa %s812, 1

</llo_original>
